<compile_context>
chip_gen: v6e
topology: v6e:2x2x1
jax: 0.10.0
libtpu: 0.0.40
codegen_flags: <defaults>
</compile_context>

<pallas_src>
import math

import jax
import jax.numpy as jnp
from jax import lax
from jax.experimental import pallas as pl
from jax.experimental.pallas import tpu as pltpu


def _rope_kernel(fstep_ref, base_ref, maske_ref, masko_ref, x_ref, o_ref,
                 cos_sc, sine_sc, sino_sc):
    # fstep/base/maske/masko: (1, L) float32 constant lane tables
    # x_ref / o_ref:          (1, tn, L) one batch element, tile of fused rows
    # scratch:                (tn, L) float32 cached cos / masked-sin tables
    ti = pl.program_id(0)          # position-tile index (outer)
    bi = pl.program_id(1)          # batch index (innermost)
    tn, L = cos_sc.shape

    # Build per-position tables once per position tile; reuse across batch.
    @pl.when(bi == 0)
    def _():
        rows = (ti * tn + lax.broadcasted_iota(jnp.int32, (tn, 1), 0)
                ).astype(jnp.float32)                      # fused-row indices
        angle = rows * fstep_ref[...] + base_ref[...]      # (tn, L), float32
        s = jnp.sin(angle)
        cos_sc[...] = jnp.cos(angle)
        sine_sc[...] = s * maske_ref[...]   # -sin on even lanes, 0 on odd
        sino_sc[...] = s * masko_ref[...]   # +sin on odd  lanes, 0 on even

    x = x_ref[0].astype(jnp.float32)                   # (tn, L)
    x_next = pltpu.roll(x, shift=L - 1, axis=1)        # y[j] = x[j+1]
    x_prev = pltpu.roll(x, shift=1, axis=1)            # y[j] = x[j-1]
    out = x * cos_sc[...] + x_next * sine_sc[...] + x_prev * sino_sc[...]
    o_ref[0] = out.astype(o_ref.dtype)


def rotary_embedding(x, dim, scale=10000.0):
    """x: (b, n, d) with d == dim. Returns (b, n, d), same dtype as x."""
    assert dim % 3 == 0, "module asserts dim % 3 == 0"
    assert dim % 2 == 0, "RoPE pairs require an even dim"
    b, n, d = x.shape
    assert d == dim

    # ---- lane densification: fold k positions into the lane axis ----------
    k = 128 // math.gcd(d, 128)         # smallest k with (k*d) % 128 == 0
    if n % k != 0:
        # TODO(synk): pad n to a multiple of k instead of the k=1 fallback.
        k = 1
    L = k * d
    R = n // k
    x_r = x.reshape(b, R, L)            # free row-major reshape

    # ---- constant lane tables (float32, built once as parameter setup) ----
    inv_freq = 1.0 / (scale ** (jnp.arange(0, d, 2, dtype=jnp.float32) / d))
    freq_lane = jnp.tile(jnp.repeat(inv_freq, 2), k)                  # (L,)
    group = (jnp.arange(L, dtype=jnp.int32) // d).astype(jnp.float32)
    freq_step = (k * freq_lane).reshape(1, L)       # angle increment per row
    angle_base = (group * freq_lane).reshape(1, L)  # angle offset within row
    lane = jnp.arange(L, dtype=jnp.int32)
    mask_e = jnp.where(lane % 2 == 0, -1.0, 0.0).astype(jnp.float32).reshape(1, L)
    mask_o = jnp.where(lane % 2 == 1, 1.0, 0.0).astype(jnp.float32).reshape(1, L)

    # ---- position-tile size: biggest that fits a conservative VMEM budget --
    bpe = x.dtype.itemsize
    per_row = 4 * L * bpe + 12 * L      # 2-buffered in + out blocks, 3 f32 tables
    budget = 20 * 1024 * 1024           # safe on v5e/v6e (128 MiB) and v7x (64 MiB)
    cap = max(1, budget // per_row)
    if R <= cap:
        tn = R                          # full extent -> no (8) sublane constraint
    else:
        divisors = [t for t in range(1, cap + 1) if R % t == 0]
        mult8 = [t for t in divisors if t % 8 == 0]
        tn = max(mult8) if mult8 else max(divisors)

    grid = (R // tn, b)                 # batch innermost -> reuse cached tables

    cost = pl.CostEstimate(
        flops=5 * b * n * d,            # 3 mul + 2 add per output element
        transcendentals=2 * n * d,      # cos + sin once per position, not per batch
        bytes_accessed=2 * b * n * d * bpe + 16 * L)

    out = pl.pallas_call(
        _rope_kernel,
        out_shape=jax.ShapeDtypeStruct((b, R, L), x.dtype),
        grid_spec=pltpu.PrefetchScalarGridSpec(
            num_scalar_prefetch=0,
            grid=grid,
            in_specs=[
                pl.BlockSpec((1, L), lambda ti, bi: (0, 0)),   # freq_step
                pl.BlockSpec((1, L), lambda ti, bi: (0, 0)),   # angle_base
                pl.BlockSpec((1, L), lambda ti, bi: (0, 0)),   # mask_e
                pl.BlockSpec((1, L), lambda ti, bi: (0, 0)),   # mask_o
                pl.BlockSpec((1, tn, L), lambda ti, bi: (bi, ti, 0)),
            ],
            out_specs=pl.BlockSpec((1, tn, L), lambda ti, bi: (bi, ti, 0)),
            scratch_shapes=[pltpu.VMEM((tn, L), jnp.float32)] * 3,
        ),
        compiler_params=pltpu.CompilerParams(
            dimension_semantics=("parallel", "arbitrary"),
            vmem_limit_bytes=32 * 1024 * 1024),
        cost_estimate=cost,
    )(freq_step, angle_base, mask_e, mask_o, x_r)
    return out.reshape(b, n, d)


def _reference(x, dim, scale=10000.0):
    """Pure-JAX transcription of the PyTorch forward for validation."""
    b, n, d = x.shape
    inv_freqs = 1.0 / (scale ** (jnp.arange(0, dim, 2, dtype=jnp.float32) / dim))
    pos = jnp.arange(n, dtype=jnp.float32)
    angle = pos[:, None] * inv_freqs[None, :]                   # (n, d//2)
    angle = jnp.repeat(angle, 2, axis=-1)                       # (n, d)
    x1 = x[..., 0::2]
    x2 = x[..., 1::2]
    c_rot = jnp.stack((-x2, x1), axis=-1).reshape(b, n, d)
    out = x.astype(jnp.float32) * jnp.cos(angle)[None] \
        + c_rot.astype(jnp.float32) * jnp.sin(angle)[None]
    return out.astype(x.dtype)


if __name__ == "__main__":
    dim = 48          # divisible by 3 (module assert) and even (pair rotation)
    b, n = 2, 16
    key = jax.random.PRNGKey(0)
    x = jax.random.normal(key, (b, n, dim), dtype=jnp.float32)

    out = rotary_embedding(x, dim)
    out = jax.block_until_ready(out)

    ref = _reference(x, dim)
    assert out.shape == (b, n, dim)
    assert jnp.allclose(out, ref, atol=1e-5, rtol=1e-5)
    print("KERNEL_OK")
</pallas_src>

<mosaic_0001>
module attributes {stable_mosaic.version = 11 : i64} {
  func.func @_rope_kernel(%arg0: i32, %arg1: i32, %arg2: memref<1x384xf32, #tpu.memory_space<vmem>>, %arg3: memref<1x384xf32, #tpu.memory_space<vmem>>, %arg4: memref<1x384xf32, #tpu.memory_space<vmem>>, %arg5: memref<1x384xf32, #tpu.memory_space<vmem>>, %arg6: memref<1x2x384xf32, #tpu.memory_space<vmem>>, %arg7: memref<1x2x384xf32, #tpu.memory_space<vmem>>, %arg8: memref<2x384xf32, #tpu.memory_space<vmem>>, %arg9: memref<2x384xf32, #tpu.memory_space<vmem>>, %arg10: memref<2x384xf32, #tpu.memory_space<vmem>>) attributes {dimension_semantics = [#tpu.dimension_semantics<parallel>, #tpu.dimension_semantics<arbitrary>], iteration_bounds = array<i64: 1, 2>, scalar_prefetch = 0 : i64, scratch_operands = 3 : i64, tpu.core_type = #tpu.core_type<tc>, window_params = [{pipeline_mode = #tpu.pipeline_mode<synchronous>, transform_indices = @transform_0, window_bounds = array<i64: 1, 384>}, {pipeline_mode = #tpu.pipeline_mode<synchronous>, transform_indices = @transform_1, window_bounds = array<i64: 1, 384>}, {pipeline_mode = #tpu.pipeline_mode<synchronous>, transform_indices = @transform_2, window_bounds = array<i64: 1, 384>}, {pipeline_mode = #tpu.pipeline_mode<synchronous>, transform_indices = @transform_3, window_bounds = array<i64: 1, 384>}, {transform_indices = @transform_4, window_bounds = array<i64: 1, 2, 384>}, {transform_indices = @transform_5, window_bounds = array<i64: 1, 2, 384>}]} {
    %c0_i32 = arith.constant 0 : i32
    %0 = arith.cmpi eq, %arg1, %c0_i32 : i32
    %1 = arith.extui %0 : i1 to i32
    %c0_i32_0 = arith.constant 0 : i32
    %2 = arith.cmpi ne, %1, %c0_i32_0 : i32
    scf.if %2 {
      %c2_i32 = arith.constant 2 : i32
      %18 = arith.muli %arg0, %c2_i32 : i32
      %19 = tpu.iota {dimensions = array<i32: 0>} : vector<2x1xi32>
      %20 = vector.broadcast %18 : i32 to vector<2x1xi32>
      %21 = arith.addi %20, %19 : vector<2x1xi32>
      %22 = arith.sitofp %21 : vector<2x1xi32> to vector<2x1xf32>
      %c0_12 = arith.constant 0 : index
      %c0_13 = arith.constant 0 : index
      %23 = vector.load %arg2[%c0_12, %c0_13] : memref<1x384xf32, #tpu.memory_space<vmem>>, vector<1x384xf32>
      %24 = vector.broadcast %22 : vector<2x1xf32> to vector<2x384xf32>
      %25 = vector.broadcast %23 : vector<1x384xf32> to vector<2x384xf32>
      %26 = arith.mulf %24, %25 : vector<2x384xf32>
      %c0_14 = arith.constant 0 : index
      %c0_15 = arith.constant 0 : index
      %27 = vector.load %arg3[%c0_14, %c0_15] : memref<1x384xf32, #tpu.memory_space<vmem>>, vector<1x384xf32>
      %28 = vector.broadcast %27 : vector<1x384xf32> to vector<2x384xf32>
      %29 = arith.addf %26, %28 : vector<2x384xf32>
      %30 = math.sin %29 : vector<2x384xf32>
      %31 = math.cos %29 : vector<2x384xf32>
      %c0_16 = arith.constant 0 : index
      %c0_17 = arith.constant 0 : index
      %32 = vector.load %arg8[%c0_16, %c0_17] : memref<2x384xf32, #tpu.memory_space<vmem>>, vector<2x384xf32>
      tpu.vector_store %arg8[%c0_16, %c0_17], %31 {strides = array<i32>} : memref<2x384xf32, #tpu.memory_space<vmem>>, vector<2x384xf32>,
      %c0_18 = arith.constant 0 : index
      %c0_19 = arith.constant 0 : index
      %33 = vector.load %arg4[%c0_18, %c0_19] : memref<1x384xf32, #tpu.memory_space<vmem>>, vector<1x384xf32>
      %34 = vector.broadcast %33 : vector<1x384xf32> to vector<2x384xf32>
      %35 = arith.mulf %30, %34 : vector<2x384xf32>
      %c0_20 = arith.constant 0 : index
      %c0_21 = arith.constant 0 : index
      %36 = vector.load %arg9[%c0_20, %c0_21] : memref<2x384xf32, #tpu.memory_space<vmem>>, vector<2x384xf32>
      tpu.vector_store %arg9[%c0_20, %c0_21], %35 {strides = array<i32>} : memref<2x384xf32, #tpu.memory_space<vmem>>, vector<2x384xf32>,
      %c0_22 = arith.constant 0 : index
      %c0_23 = arith.constant 0 : index
      %37 = vector.load %arg5[%c0_22, %c0_23] : memref<1x384xf32, #tpu.memory_space<vmem>>, vector<1x384xf32>
      %38 = vector.broadcast %37 : vector<1x384xf32> to vector<2x384xf32>
      %39 = arith.mulf %30, %38 : vector<2x384xf32>
      %c0_24 = arith.constant 0 : index
      %c0_25 = arith.constant 0 : index
      %40 = vector.load %arg10[%c0_24, %c0_25] : memref<2x384xf32, #tpu.memory_space<vmem>>, vector<2x384xf32>
      tpu.vector_store %arg10[%c0_24, %c0_25], %39 {strides = array<i32>} : memref<2x384xf32, #tpu.memory_space<vmem>>, vector<2x384xf32>,
    } else {
    }
    %c0 = arith.constant 0 : index
    %c0_1 = arith.constant 0 : index
    %c0_2 = arith.constant 0 : index
    %3 = vector.load %arg6[%c0, %c0_1, %c0_2] : memref<1x2x384xf32, #tpu.memory_space<vmem>>, vector<1x2x384xf32>
    %4 = vector.shape_cast %3 : vector<1x2x384xf32> to vector<2x384xf32>
    %c383_i32 = arith.constant 383 : i32
    %5 = tpu.dynamic_rotate %4 by %c383_i32 dim 1 : vector<2x384xf32>, i32 -> vector<2x384xf32>
    %c1_i32 = arith.constant 1 : i32
    %6 = tpu.dynamic_rotate %4 by %c1_i32 dim 1 : vector<2x384xf32>, i32 -> vector<2x384xf32>
    %c0_3 = arith.constant 0 : index
    %c0_4 = arith.constant 0 : index
    %7 = vector.load %arg8[%c0_3, %c0_4] : memref<2x384xf32, #tpu.memory_space<vmem>>, vector<2x384xf32>
    %8 = arith.mulf %4, %7 : vector<2x384xf32>
    %c0_5 = arith.constant 0 : index
    %c0_6 = arith.constant 0 : index
    %9 = vector.load %arg9[%c0_5, %c0_6] : memref<2x384xf32, #tpu.memory_space<vmem>>, vector<2x384xf32>
    %10 = arith.mulf %5, %9 : vector<2x384xf32>
    %11 = arith.addf %8, %10 : vector<2x384xf32>
    %c0_7 = arith.constant 0 : index
    %c0_8 = arith.constant 0 : index
    %12 = vector.load %arg10[%c0_7, %c0_8] : memref<2x384xf32, #tpu.memory_space<vmem>>, vector<2x384xf32>
    %13 = arith.mulf %6, %12 : vector<2x384xf32>
    %14 = arith.addf %11, %13 : vector<2x384xf32>
    %c0_9 = arith.constant 0 : index
    %c0_10 = arith.constant 0 : index
    %c0_11 = arith.constant 0 : index
    %15 = vector.load %arg7[%c0_9, %c0_10, %c0_11] : memref<1x2x384xf32, #tpu.memory_space<vmem>>, vector<1x2x384xf32>
    %16 = vector.shape_cast %15 : vector<1x2x384xf32> to vector<2x384xf32>
    %17 = vector.shape_cast %14 : vector<2x384xf32> to vector<1x2x384xf32>
    tpu.vector_store %arg7[%c0_9, %c0_10, %c0_11], %17 {strides = array<i32>} : memref<1x2x384xf32, #tpu.memory_space<vmem>>, vector<1x2x384xf32>,
    return
  }
  func.func @transform_0(%arg0: i32, %arg1: i32) -> (i32, i32) {
    %c0_i32 = arith.constant 0 : i32
    %c0_i32_0 = arith.constant 0 : i32
    %c0_i32_1 = arith.constant 0 : i32
    return %c0_i32, %c0_i32_0 : i32, i32
  }
  func.func @transform_1(%arg0: i32, %arg1: i32) -> (i32, i32) {
    %c0_i32 = arith.constant 0 : i32
    %c0_i32_0 = arith.constant 0 : i32
    %c0_i32_1 = arith.constant 0 : i32
    return %c0_i32, %c0_i32_0 : i32, i32
  }
  func.func @transform_2(%arg0: i32, %arg1: i32) -> (i32, i32) {
    %c0_i32 = arith.constant 0 : i32
    %c0_i32_0 = arith.constant 0 : i32
    %c0_i32_1 = arith.constant 0 : i32
    return %c0_i32, %c0_i32_0 : i32, i32
  }
  func.func @transform_3(%arg0: i32, %arg1: i32) -> (i32, i32) {
    %c0_i32 = arith.constant 0 : i32
    %c0_i32_0 = arith.constant 0 : i32
    %c0_i32_1 = arith.constant 0 : i32
    return %c0_i32, %c0_i32_0 : i32, i32
  }
  func.func @transform_4(%arg0: i32, %arg1: i32) -> (i32, i32, i32) {
    %c0_i32 = arith.constant 0 : i32
    %c0_i32_0 = arith.constant 0 : i32
    return %arg1, %arg0, %c0_i32 : i32, i32, i32
  }
  func.func @transform_5(%arg0: i32, %arg1: i32) -> (i32, i32, i32) {
    %c0_i32 = arith.constant 0 : i32
    %c0_i32_0 = arith.constant 0 : i32
    return %arg1, %arg0, %c0_i32 : i32, i32, i32
  }
}

</mosaic_0001>

<llo_original>
// kernel: tpu_custom_call.1
$region0: #{tpu_custom_call.1}
  #allocation0 [shape = 'u32[]', space=smem, size = 0x4, offset = 0x4, fixed_abs, tag = 'smem constant byte address 0x4 - core index']
  #allocation1 [shape = 'u32[144,128]{1,0:T(1,128)}', space=vmem, size = 0x12000, scoped, tag = 'internal scratch']
  #allocation2 [shape = 'f32[2,384]{1,0:T(2,128)}', space=vmem, size = 0xc00, scoped, tag = 'scratch operand']
  #allocation3 [shape = 'f32[2,384]{1,0:T(2,128)}', space=vmem, size = 0xc00, scoped, tag = 'scratch operand']
  #allocation4 [shape = 'f32[2,384]{1,0:T(2,128)}', space=vmem, size = 0xc00, scoped, tag = 'scratch operand']
  %s0 = inlined_call_operand.hbm [shape: f32[1,384], index: 0, kind: input, shape index: {}]
  %s1 = inlined_call_operand.hbm [shape: f32[1,384], index: 1, kind: input, shape index: {}]
  %s2 = inlined_call_operand.vmem [shape: f32[1,384], index: 2, kind: input, shape index: {}]
  %s3 = inlined_call_operand.hbm [shape: f32[1,384], index: 3, kind: input, shape index: {}]
  %s4 = inlined_call_operand.hbm [shape: f32[2,2,384], index: 4, kind: input, shape index: {}]
  %s5 = inlined_call_operand.hbm [shape: f32[2,2,384], index: 5, kind: output, shape index: {}]
  %s6 = sld [smem:[#allocation0]]
  $region73: #{tpu_custom_call.1} parent=0
    _
  %s8 = ssub.s32 1, %s6
  %s9 = scalar_select 0, %s8, %s6
  $region1: #{tpu_custom_call.1} parent=0
    #allocation5 [shape = 'u8[1536]{0}', space=vmem, size = 0x800, scoped, tag = 'input window, operand 0, single buffered']
    #allocation6 [shape = 's32[2]{0}', space=sflag, size = 0x8, scoped, tag = 'scoped memory for tpu_custom_call.1']
    #allocation7 [shape = 's32[2]{0}', space=sflag, size = 0x8, scoped, tag = 'scoped memory for tpu_custom_call.1']
    #allocation8 [shape = 'u8[1536]{0}', space=vmem, size = 0x800, scoped, tag = 'input window, operand 1, single buffered']
    #allocation9 [shape = 's32[1]{0}', space=sflag, size = 0x4, scoped, tag = 'scoped memory for tpu_custom_call.1']
    #allocation10 [shape = 'u8[1536]{0}', space=vmem, size = 0x800, scoped, tag = 'input window, operand 3, single buffered']
    #allocation11 [shape = 'u8[6144]{0}', space=vmem, size = 0x1800, scoped, tag = 'input window, operand 4']
    #allocation12 [shape = 's32[2]{0}', space=sflag, size = 0x8, scoped, tag = 'scoped memory for tpu_custom_call.1']
    #allocation13 [shape = 'u8[6144]{0}', space=vmem, size = 0x1800, scoped, tag = 'output window, operand 0']
    %10 = vsyncpa [#allocation6], 0
    %11 = vsyncpa [#allocation9], 0
    %12 = vsyncpa [#allocation12], 0
    %s13 = scalar_lea.sflag [#allocation12], 1
    %14 = vsyncpa %s13, 0
    %15 = vsyncpa [#allocation7], 0
    %s16 = scalar_lea.sflag [#allocation7], 1
    %17 = vsyncpa %s16, 0
    loop: start=0, step=1, limit=4
    $region2: #{tpu_custom_call.1} parent=1 // loop_pre_header
      _
    $region3: #{tpu_custom_call.1} parent=1 // loop_header
      %s19 = sphi 0, %s23
      %p20 = scmp.ge.s32.totalorder %s19, 4
      %s26 = sphi 0, %s38
      %s27 = sphi 0, %s34
      %s28 = sphi 0, %s26
      %s29 = sphi 0, %s27
      %s30 = sphi 0, %s28
      %s31 = sphi 0, %s29
      %s39 = sphi 0, %s39
      %s41 = sphi 0, %s39
      %s42 = sphi 0, %s41
      %s56 = sphi 0, %s42
      %s60 = sphi 0, %s60
      %s62 = sphi 0, %s60
      %s63 = sphi 0, %s62
      %s77 = sphi 0, %s63
      %s81 = sphi 0, %s81
      %s83 = sphi 0, %s81
      %s84 = sphi 0, %s83
      %s98 = sphi 0, %s84
      %s102 = sphi 0, %s102
      %s104 = sphi 0, %s102
      %s105 = sphi 0, %s104
      %s119 = sphi 0, %s105
      %s127 = sphi 0, %s129
      %s130 = sphi 0, %s127
      %s131 = sphi 0, %s130
      %s147 = sphi 0, %s131
      %s155 = sphi 0, %s157
      %s158 = sphi 0, %s155
      %s159 = sphi 0, %s158
      %s175 = sphi 0, %s159
    $region4: #{tpu_custom_call.1} parent=1 // loop_header_branch
      %22 = sbr.rel (%p20) target = $region8
    $region5: #{tpu_custom_call.1} parent=1 // loop_body
      %s24 = ssub.s32 %s19, 1
      %s25 = ssub.s32 %s19, 2
      %s32 = sadd.s32 1, %s27
      %p33 = scmp.ge.s32.totalorder %s32, 2
      %s34 = scalar_select %p33, 0, %s32
      %s35 = sadd.s32 1, %s26
      %s36 = scalar_select %p33, %s35, %s26
      %p37 = scmp.ge.s32.totalorder %s36, 1
      %s38 = scalar_select %p37, 0, %s36
      %s40 = sadd.s32 %s39, 1
      %p43 = scmp.eq.s32.totalorder %s19, 1
      %p44 = scmp.ne.s32.totalorder %s39, %s41
      %p45 = scmp.eq.s32.totalorder %s19, 0
      %p46 = por %p44, %p45
      %p47 = scmp.ne.s32.totalorder %s39, %s41
      %p48 = scmp.eq.s32.totalorder %s24, 1
      %p49 = por %p47, %p48
      %p50 = scmp.ne.s32.totalorder %s41, %s42
      %p51 = scmp.eq.s32.totalorder %s24, 0
      %p52 = por %p50, %p51
      %p53 = scmp.ne.s32.totalorder %s41, %s42
      %p54 = scmp.eq.s32.totalorder %s25, 1
      %p55 = por %p53, %p54
      %p57 = scmp.ne.s32.totalorder %s42, %s56
      %p58 = scmp.eq.s32.totalorder %s25, 0
      %p59 = por %p57, %p58
      %s61 = sadd.s32 %s60, 1
      %p64 = scmp.eq.s32.totalorder %s19, 1
      %p65 = scmp.ne.s32.totalorder %s60, %s62
      %p66 = scmp.eq.s32.totalorder %s19, 0
      %p67 = por %p65, %p66
      %p68 = scmp.ne.s32.totalorder %s60, %s62
      %p69 = scmp.eq.s32.totalorder %s24, 1
      %p70 = por %p68, %p69
      %p71 = scmp.ne.s32.totalorder %s62, %s63
      %p72 = scmp.eq.s32.totalorder %s24, 0
      %p73 = por %p71, %p72
      %p74 = scmp.ne.s32.totalorder %s62, %s63
      %p75 = scmp.eq.s32.totalorder %s25, 1
      %p76 = por %p74, %p75
      %p78 = scmp.ne.s32.totalorder %s63, %s77
      %p79 = scmp.eq.s32.totalorder %s25, 0
      %p80 = por %p78, %p79
      %s82 = sadd.s32 %s81, 1
      %p85 = scmp.eq.s32.totalorder %s19, 1
      %p86 = scmp.ne.s32.totalorder %s81, %s83
      %p87 = scmp.eq.s32.totalorder %s19, 0
      %p88 = por %p86, %p87
      %p89 = scmp.ne.s32.totalorder %s81, %s83
      %p90 = scmp.eq.s32.totalorder %s24, 1
      %p91 = por %p89, %p90
      %p92 = scmp.ne.s32.totalorder %s83, %s84
      %p93 = scmp.eq.s32.totalorder %s24, 0
      %p94 = por %p92, %p93
      %p95 = scmp.ne.s32.totalorder %s83, %s84
      %p96 = scmp.eq.s32.totalorder %s25, 1
      %p97 = por %p95, %p96
      %p99 = scmp.ne.s32.totalorder %s84, %s98
      %p100 = scmp.eq.s32.totalorder %s25, 0
      %p101 = por %p99, %p100
      %s103 = sadd.s32 %s102, 1
      %p106 = scmp.eq.s32.totalorder %s19, 1
      %p107 = scmp.ne.s32.totalorder %s102, %s104
      %p108 = scmp.eq.s32.totalorder %s19, 0
      %p109 = por %p107, %p108
      %p110 = scmp.ne.s32.totalorder %s102, %s104
      %p111 = scmp.eq.s32.totalorder %s24, 1
      %p112 = por %p110, %p111
      %p113 = scmp.ne.s32.totalorder %s104, %s105
      %p114 = scmp.eq.s32.totalorder %s24, 0
      %p115 = por %p113, %p114
      %p116 = scmp.ne.s32.totalorder %s104, %s105
      %p117 = scmp.eq.s32.totalorder %s25, 1
      %p118 = por %p116, %p117
      %p120 = scmp.ne.s32.totalorder %s105, %s119
      %p121 = scmp.eq.s32.totalorder %s25, 0
      %p122 = por %p120, %p121
      %s123 = ssub.s32 %s27, %s34
      %s124 = ssub.s32 %s26, %s38
      %s125 = sor.u32 %s123, %s124
      %p126 = scmp.eq.s32.totalorder %s125, 0
      %s128 = sadd.s32 %s127, 1
      %s129 = scalar_select %p126, %s127, %s128
      %p132 = pneg %p126
      %p133 = scmp.eq.s32.totalorder %s19, 1
      %p134 = por %p132, %p133
      %p135 = scmp.ne.s32.totalorder %s127, %s130
      %p136 = scmp.eq.s32.totalorder %s19, 0
      %p137 = por %p135, %p136
      %p138 = scmp.ne.s32.totalorder %s127, %s130
      %p139 = scmp.eq.s32.totalorder %s24, 1
      %p140 = por %p138, %p139
      %p141 = scmp.ne.s32.totalorder %s130, %s131
      %p142 = scmp.eq.s32.totalorder %s24, 0
      %p143 = por %p141, %p142
      %p144 = scmp.ne.s32.totalorder %s130, %s131
      %p145 = scmp.eq.s32.totalorder %s25, 1
      %p146 = por %p144, %p145
      %p148 = scmp.ne.s32.totalorder %s131, %s147
      %p149 = scmp.eq.s32.totalorder %s25, 0
      %p150 = por %p148, %p149
      %s151 = ssub.s32 %s27, %s34
      %s152 = ssub.s32 %s26, %s38
      %s153 = sor.u32 %s151, %s152
      %p154 = scmp.eq.s32.totalorder %s153, 0
      %s156 = sadd.s32 %s155, 1
      %s157 = scalar_select %p154, %s155, %s156
      %p160 = pneg %p154
      %p161 = scmp.eq.s32.totalorder %s19, 1
      %p162 = por %p160, %p161
      %p163 = scmp.ne.s32.totalorder %s155, %s158
      %p164 = scmp.eq.s32.totalorder %s19, 0
      %p165 = por %p163, %p164
      %p166 = scmp.ne.s32.totalorder %s155, %s158
      %p167 = scmp.eq.s32.totalorder %s24, 1
      %p168 = por %p166, %p167
      %p169 = scmp.ne.s32.totalorder %s158, %s159
      %p170 = scmp.eq.s32.totalorder %s24, 0
      %p171 = por %p169, %p170
      %p172 = scmp.ne.s32.totalorder %s158, %s159
      %p173 = scmp.eq.s32.totalorder %s25, 1
      %p174 = por %p172, %p173
      %p176 = scmp.ne.s32.totalorder %s159, %s175
      %p177 = scmp.eq.s32.totalorder %s25, 0
      %p178 = por %p176, %p177
      %p179 = scmp.le.s32.totalorder 1, %s19
      %p180 = scmp.lt.s32.totalorder %s19, 3
      %p181 = pnand %p179, %p180
      %p182 = pneg %p181
      // Predicated region
      $region9: #{tpu_custom_call.1} parent=5 // pred_check
        _
      $region10: #{tpu_custom_call.1} parent=5 // pred_check_branch
        %184 = sbr.rel (%p181) target = $region12
      $region11: #{tpu_custom_call.1} parent=5 // pred_region
        %s185 = ssub.s32 %s19, 1
        // Predicated region
        $region13: #{tpu_custom_call.1} parent=11 // pred_check
          %p186 = pneg %p52
        $region14: #{tpu_custom_call.1} parent=11 // pred_check_branch
          %188 = sbr.rel (%p186) target = $region16
        $region15: #{tpu_custom_call.1} parent=11 // pred_region
          %s190 = ssub.s32 48, 48
          %191 = vsyncadd [#allocation6], %s190
          %s193 = sshll.u32 [#allocation5], 4
          %s194 = int_to_ptr.vmem [resolvable:$true] %s193
          %196 = dma.hbm_to_vmem [thread:$0]  %s0, 48, %s194, [#allocation6]
        $region16: #{tpu_custom_call.1} parent=11 // pred_fallthru
          _
        // Predicated region
        $region17: #{tpu_custom_call.1} parent=11 // pred_check
          %p197 = pneg %p73
        $region18: #{tpu_custom_call.1} parent=11 // pred_check_branch
          %199 = sbr.rel (%p197) target = $region20
        $region19: #{tpu_custom_call.1} parent=11 // pred_region
          %s201 = ssub.s32 48, 48
          %202 = vsyncadd [#allocation9], %s201
          %s204 = sshll.u32 [#allocation8], 4
          %s205 = int_to_ptr.vmem [resolvable:$true] %s204
          %207 = dma.hbm_to_vmem [thread:$0]  %s1, 48, %s205, [#allocation9]
        $region20: #{tpu_custom_call.1} parent=11 // pred_fallthru
          _
        // Predicated region
        $region21: #{tpu_custom_call.1} parent=11 // pred_check
          %p208 = pneg %p94
        $region22: #{tpu_custom_call.1} parent=11 // pred_check_branch
          %210 = sbr.rel (%p208) target = $region24
        $region23: #{tpu_custom_call.1} parent=11 // pred_region
          _
        $region24: #{tpu_custom_call.1} parent=11 // pred_fallthru
          _
        // Predicated region
        $region25: #{tpu_custom_call.1} parent=11 // pred_check
          %p211 = pneg %p115
        $region26: #{tpu_custom_call.1} parent=11 // pred_check_branch
          %213 = sbr.rel (%p211) target = $region28
        $region27: #{tpu_custom_call.1} parent=11 // pred_region
          %s215 = ssub.s32 48, 48
          %216 = vsyncadd [#allocation9], %s215
          %s218 = sshll.u32 [#allocation10], 4
          %s219 = int_to_ptr.vmem [resolvable:$true] %s218
          %221 = dma.hbm_to_vmem [thread:$0]  %s3, 48, %s219, [#allocation9]
        $region28: #{tpu_custom_call.1} parent=11 // pred_fallthru
          _
      $region12: #{tpu_custom_call.1} parent=5 // pred_fallthru
        _
      %p222 = scmp.lt.s32.totalorder %s19, 2
      // Predicated region
      $region29: #{tpu_custom_call.1} parent=5 // pred_check
        %p223 = pneg %p222
      $region30: #{tpu_custom_call.1} parent=5 // pred_check_branch
        %225 = sbr.rel (%p223) target = $region32
      $region31: #{tpu_custom_call.1} parent=5 // pred_region
        // Predicated region
        $region33: #{tpu_custom_call.1} parent=31 // pred_check
          %p226 = pneg %p137
        $region34: #{tpu_custom_call.1} parent=31 // pred_check_branch
          %228 = sbr.rel (%p226) target = $region36
        $region35: #{tpu_custom_call.1} parent=31 // pred_region
          %s229 = sand.u32 %s127, 1
          %s230 = scalar_lea.sflag [#allocation12], %s229
          %s231 = sand.u32 %s127, 1
          %s232 = smul.addr %s231, 6
          %s233 = scalar_lea.vmem [#allocation11], %s232
          %s235 = ssub.s32 96, 96
          %236 = vsyncadd %s230, %s235
          %s237 = smul.addr %s26, 3
          %s238 = smul.addr %s27, 3
          %s239 = sadd.s32 %s237, %s238
          %s240 = smul.addr %s239, 32
          %s241 = scalar_lea.hbm %s4, %s240
          %s243 = sshll.u32 %s233, 4
          %s244 = int_to_ptr.vmem [resolvable:$true] %s243
          %246 = dma.hbm_to_vmem [thread:$0]  %s241, 96, %s244, %s230
        $region36: #{tpu_custom_call.1} parent=31 // pred_fallthru
          _
      $region32: #{tpu_custom_call.1} parent=5 // pred_fallthru
        _
      %p247 = scmp.le.s32.totalorder 1, %s19
      %p248 = scmp.lt.s32.totalorder %s19, 3
      %p249 = pnand %p247, %p248
      %p250 = pneg %p249
      // Predicated region
      $region37: #{tpu_custom_call.1} parent=5 // pred_check
        _
      $region38: #{tpu_custom_call.1} parent=5 // pred_check_branch
        %252 = sbr.rel (%p249) target = $region40
      $region39: #{tpu_custom_call.1} parent=5 // pred_region
        %s253 = ssub.s32 %s19, 1
        // Predicated region
        $region41: #{tpu_custom_call.1} parent=39 // pred_check
          %p254 = pneg %p52
        $region42: #{tpu_custom_call.1} parent=39 // pred_check_branch
          %256 = sbr.rel (%p254) target = $region44
        $region43: #{tpu_custom_call.1} parent=39 // pred_region
          %257 = dma.done [#allocation6], 48
        $region44: #{tpu_custom_call.1} parent=39 // pred_fallthru
          _
        // Predicated region
        $region45: #{tpu_custom_call.1} parent=39 // pred_check
          %p258 = pneg %p73
        $region46: #{tpu_custom_call.1} parent=39 // pred_check_branch
          %260 = sbr.rel (%p258) target = $region48
        $region47: #{tpu_custom_call.1} parent=39 // pred_region
          %261 = dma.done [#allocation9], 48
        $region48: #{tpu_custom_call.1} parent=39 // pred_fallthru
          _
        // Predicated region
        $region49: #{tpu_custom_call.1} parent=39 // pred_check
          %p262 = pneg %p115
        $region50: #{tpu_custom_call.1} parent=39 // pred_check_branch
          %264 = sbr.rel (%p262) target = $region52
        $region51: #{tpu_custom_call.1} parent=39 // pred_region
          %265 = dma.done [#allocation9], 48
        $region52: #{tpu_custom_call.1} parent=39 // pred_fallthru
          _
        %s266 = sand.u32 %s130, 1
        %s267 = scalar_lea.sflag [#allocation12], %s266
        %s268 = sand.u32 %s130, 1
        %s269 = smul.addr %s268, 6
        %s270 = scalar_lea.vmem [#allocation11], %s269
        // Predicated region
        $region53: #{tpu_custom_call.1} parent=39 // pred_check
          %p271 = pneg %p143
        $region54: #{tpu_custom_call.1} parent=39 // pred_check_branch
          %273 = sbr.rel (%p271) target = $region56
        $region55: #{tpu_custom_call.1} parent=39 // pred_region
          %274 = dma.done %s267, 96
        $region56: #{tpu_custom_call.1} parent=39 // pred_fallthru
          _
        %p275 = pneg %p52
        %p276 = pneg %p49
        %p277 = pneg %p73
        %p278 = pneg %p70
        %p279 = pneg %p94
        %p280 = pneg %p91
        %p281 = pneg %p115
        %p282 = pneg %p112
        %s283 = sand.u32 %s130, 1
        %s284 = scalar_lea.sflag [#allocation12], %s283
        %s285 = sand.u32 %s130, 1
        %s286 = smul.addr %s285, 6
        %s287 = scalar_lea.vmem [#allocation11], %s286
        %p288 = pneg %p143
        %p289 = pneg %p140
        %p290 = pneg %p171
        %p291 = pneg %p168
        %s292 = sand.u32 %s158, 1
        %s293 = scalar_lea.sflag [#allocation7], %s292
        %s294 = sand.u32 %s158, 1
        %s295 = smul.addr %s294, 6
        %s296 = scalar_lea.vmem [#allocation13], %s295
        %p297 = scmp.eq.s32.totalorder %s29, 0
        // Predicated region
        $region57: #{tpu_custom_call.1} parent=39 // pred_check
          %p298 = pneg %p297
        $region58: #{tpu_custom_call.1} parent=39 // pred_check_branch
          %300 = sbr.rel (%p298) target = $region60
        $region59: #{tpu_custom_call.1} parent=39 // pred_region
          %s301 = smul.u32 %s28, 2
          %v302 = vlaneseq
          %v303 = vshrl.u32 %v302, 7
          %v304 = vstv %s301
          %v305 = vadd.s32 %v304, %v303
          %v306 = vcvt.s32.f32 %v305
          %v307 = vld [vmem:[#allocation5] sm:$0x7]
          %v309 = vlaneseq
          %v310 = vshrl.u32 %v309, 7
          %v311 = vsub.s32 0, %v310
          %v312 = vrot.slane %v307, %v311
          %v313 = vlaneseq
          %v314 = vshrl.u32 %v313, 7
          %v315 = vsub.s32 1, %v314
          %v316 = vrot.slane %v307, %v315
          %v317 = vlaneseq
          %v318 = vshrl.u32 %v317, 7
          %v319 = vsub.s32 2, %v318
          %v320 = vrot.slane %v307, %v319
          %v324 = vmul.f32 %v306, %v312
          %v325 = vmul.f32 %v306, %v316
          %v326 = vmul.f32 %v306, %v320
          %v327 = vld [vmem:[#allocation8] sm:$0x7]
          %v329 = vlaneseq
          %v330 = vshrl.u32 %v329, 7
          %v331 = vsub.s32 0, %v330
          %v332 = vrot.slane %v327, %v331
          %v333 = vlaneseq
          %v334 = vshrl.u32 %v333, 7
          %v335 = vsub.s32 1, %v334
          %v336 = vrot.slane %v327, %v335
          %v337 = vlaneseq
          %v338 = vshrl.u32 %v337, 7
          %v339 = vsub.s32 2, %v338
          %v340 = vrot.slane %v327, %v339
          %v344 = vadd.f32 %v324, %v332
          %v345 = vadd.f32 %v325, %v336
          %v346 = vadd.f32 %v326, %v340
          %v347 = vand.u32 2147483647, %v344
          %vm348 = vcmp.le.f32.partialorder %v347, 0.7853982
          %vm349 = vcmp.lt.s32.totalorder %v344, 0
          %v350 = vand.u32 %v344, 2139095040
          %v351 = vshrl.u32 %v350, 23
          %v352 = vsub.s32 %v351, 127
          %v353 = vand.u32 2147483647, %v344
          %v354 = vand.u32 %v353, 8388607
          %v355 = vor.u32 %v354, 8388608
          %v356 = vsub.s32 0, %v355
          %v357 = vadd.s32 %v352, 1
          %vm358 = vcmp.gt.s32.totalorder %v357, 0
          %v359 = vsel %vm358, %v357, 0
          %v360 = vshrl.u32 %v359, 5
          %v361 = vand.u32 %v359, 31
          %v362 = vsub.s32 32, %v361
          %v363 = vshrl.u32 683565275, %v362
          %v364 = vshll.u32 683565275, %v361
          %v365 = vshrl.u32 2475754826, %v362
          %v366 = vor.u32 %v364, %v365
          %v367 = vshll.u32 2475754826, %v361
          %v368 = vshrl.u32 2131351028, %v362
          %v369 = vor.u32 %v367, %v368
          %v370 = vshll.u32 2131351028, %v361
          %v371 = vshrl.u32 2102212464, %v362
          %v372 = vor.u32 %v370, %v371
          %v373 = vshll.u32 2102212464, %v361
          %v374 = vshrl.u32 920167782, %v362
          %v375 = vor.u32 %v373, %v374
          %v376 = vshll.u32 920167782, %v361
          %v377 = vshrl.u32 1326507024, %v362
          %v378 = vor.u32 %v376, %v377
          %vm379 = vcmp.lt.s32.totalorder %v360, 1
          %vm380 = vcmp.lt.s32.totalorder %v360, 2
          %vm381 = vcmp.lt.s32.totalorder %v360, 3
          %vm382 = vcmp.lt.s32.totalorder %v360, 4
          %v383 = vsel %vm379, %v363, %v366
          %v384 = vsel %vm382, %v372, 2102212464
          %v385 = vsel %vm381, %v369, %v384
          %v386 = vsel %vm380, %v383, %v385
          %v387 = vsel %vm379, %v366, %v369
          %v388 = vsel %vm382, %v375, 920167782
          %v389 = vsel %vm381, %v372, %v388
          %v390 = vsel %vm380, %v387, %v389
          %v391 = vsel %vm379, %v369, %v372
          %v392 = vsel %vm382, %v378, 1326507024
          %v393 = vsel %vm381, %v375, %v392
          %v394 = vsel %vm380, %v391, %v393
          %v395 = vshll.u32 %v355, 8
          %v396 = vmul.u32.u64.compose %v395, %v394
          %v397 = vextract.low.u32 %v396
          %v398 = vextract.high.u32 %v396
          %v399 = vmul.u32.u64.compose %v395, %v390
          %v400 = vextract.low.u32 %v399
          %v401 = vextract.high.u32 %v399
          %v402 = vmul.u32 %v395, %v386
          %v403 = vadd.s32 %v398, %v400
          %vm404 = vc.u32 %v398, %v400
          %v405 = vadd.s32 %v401, 1
          %v406 = vsel %vm404, %v405, %v401
          %v407 = vadd.s32 %v402, %v406
          %v408 = vadd.s32 %v407, 536870912
          %v409 = vshrl.u32 %v408, 30
          %v410 = vshll.u32 %v409, 30
          %v411 = vsub.s32 %v407, %v410
          %vm412 = vcmp.lt.s32.totalorder %v411, 0
          %v413 = vsub.s32 0, %v411
          %v414 = vsel %vm412, %v413, %v411
          %v415 = vclz %v414
          %v416 = vsub.s32 %v415, 2
          %vm417 = vcmp.gt.s32.totalorder 0, %v416
          %v418 = vsel %vm417, 0, %v416
          %v419 = vsub.s32 32, %v418
          %v420 = vshll.u32 %v411, %v418
          %v421 = vshrl.u32 %v403, %v419
          %v422 = vor.u32 %v420, %v421
          %v423 = vsub.s32 4294967266, %v418
          %v424 = vadd.s32 %v423, 127
          %v425 = vshll.u32 %v424, 23
          %v426 = vor.u32 4788187, %v425
          %v427 = vand.u32 2147483647, %v426
          %v429 = vcvt.s32.f32 %v422
          %v430 = vmul.f32 %v429, %v427
          %v431 = vxor.u32 %v430, 2147483648
          %v432 = vsel %vm349, %v431, %v430
          %v433 = vsub.s32 4, %v409
          %v434 = vsel %vm349, %v433, %v409
          %v435 = vsel %vm348, %v344, %v432
          %v436 = vsel %vm348, 0, %v434
          %v437 = vcosq.f32.pop %v435
          %v438 = vsinq.f32.pop %v435
          %vm439 = vweird.f32 %v344
          %v440 = vadd.s32 %v436, 3
          %v441 = vand.u32 %v440, 3
          %vm442 = vcmp.lt.s32.totalorder %v441, 2
          %vm443 = vcmp.eq.s32.totalorder %v441, 0
          %v444 = vxor.u32 %v438, 2147483648
          %v445 = vsel %vm443, %v437, %v444
          %vm446 = vcmp.eq.s32.totalorder %v441, 2
          %v447 = vxor.u32 %v437, 2147483648
          %v448 = vsel %vm446, %v447, %v438
          %v449 = vsel %vm442, %v445, %v448
          %v450 = vsel %vm439, nan, %v449
          %v451 = vand.u32 2147483647, %v345
          %vm452 = vcmp.le.f32.partialorder %v451, 0.7853982
          %vm453 = vcmp.lt.s32.totalorder %v345, 0
          %v454 = vand.u32 %v345, 2139095040
          %v455 = vshrl.u32 %v454, 23
          %v456 = vsub.s32 %v455, 127
          %v457 = vand.u32 2147483647, %v345
          %v458 = vand.u32 %v457, 8388607
          %v459 = vor.u32 %v458, 8388608
          %v460 = vsub.s32 0, %v459
          %v461 = vadd.s32 %v456, 1
          %vm462 = vcmp.gt.s32.totalorder %v461, 0
          %v463 = vsel %vm462, %v461, 0
          %v464 = vshrl.u32 %v463, 5
          %v465 = vand.u32 %v463, 31
          %v466 = vsub.s32 32, %v465
          %v467 = vshrl.u32 683565275, %v466
          %v468 = vshll.u32 683565275, %v465
          %v469 = vshrl.u32 2475754826, %v466
          %v470 = vor.u32 %v468, %v469
          %v471 = vshll.u32 2475754826, %v465
          %v472 = vshrl.u32 2131351028, %v466
          %v473 = vor.u32 %v471, %v472
          %v474 = vshll.u32 2131351028, %v465
          %v475 = vshrl.u32 2102212464, %v466
          %v476 = vor.u32 %v474, %v475
          %v477 = vshll.u32 2102212464, %v465
          %v478 = vshrl.u32 920167782, %v466
          %v479 = vor.u32 %v477, %v478
          %v480 = vshll.u32 920167782, %v465
          %v481 = vshrl.u32 1326507024, %v466
          %v482 = vor.u32 %v480, %v481
          %vm483 = vcmp.lt.s32.totalorder %v464, 1
          %vm484 = vcmp.lt.s32.totalorder %v464, 2
          %vm485 = vcmp.lt.s32.totalorder %v464, 3
          %vm486 = vcmp.lt.s32.totalorder %v464, 4
          %v487 = vsel %vm483, %v467, %v470
          %v488 = vsel %vm486, %v476, 2102212464
          %v489 = vsel %vm485, %v473, %v488
          %v490 = vsel %vm484, %v487, %v489
          %v491 = vsel %vm483, %v470, %v473
          %v492 = vsel %vm486, %v479, 920167782
          %v493 = vsel %vm485, %v476, %v492
          %v494 = vsel %vm484, %v491, %v493
          %v495 = vsel %vm483, %v473, %v476
          %v496 = vsel %vm486, %v482, 1326507024
          %v497 = vsel %vm485, %v479, %v496
          %v498 = vsel %vm484, %v495, %v497
          %v499 = vshll.u32 %v459, 8
          %v500 = vmul.u32.u64.compose %v499, %v498
          %v501 = vextract.low.u32 %v500
          %v502 = vextract.high.u32 %v500
          %v503 = vmul.u32.u64.compose %v499, %v494
          %v504 = vextract.low.u32 %v503
          %v505 = vextract.high.u32 %v503
          %v506 = vmul.u32 %v499, %v490
          %v507 = vadd.s32 %v502, %v504
          %vm508 = vc.u32 %v502, %v504
          %v509 = vadd.s32 %v505, 1
          %v510 = vsel %vm508, %v509, %v505
          %v511 = vadd.s32 %v506, %v510
          %v512 = vadd.s32 %v511, 536870912
          %v513 = vshrl.u32 %v512, 30
          %v514 = vshll.u32 %v513, 30
          %v515 = vsub.s32 %v511, %v514
          %vm516 = vcmp.lt.s32.totalorder %v515, 0
          %v517 = vsub.s32 0, %v515
          %v518 = vsel %vm516, %v517, %v515
          %v519 = vclz %v518
          %v520 = vsub.s32 %v519, 2
          %vm521 = vcmp.gt.s32.totalorder 0, %v520
          %v522 = vsel %vm521, 0, %v520
          %v523 = vsub.s32 32, %v522
          %v524 = vshll.u32 %v515, %v522
          %v525 = vshrl.u32 %v507, %v523
          %v526 = vor.u32 %v524, %v525
          %v527 = vsub.s32 4294967266, %v522
          %v528 = vadd.s32 %v527, 127
          %v529 = vshll.u32 %v528, 23
          %v530 = vor.u32 4788187, %v529
          %v531 = vand.u32 2147483647, %v530
          %v533 = vcvt.s32.f32 %v526
          %v534 = vmul.f32 %v533, %v531
          %v535 = vxor.u32 %v534, 2147483648
          %v536 = vsel %vm453, %v535, %v534
          %v537 = vsub.s32 4, %v513
          %v538 = vsel %vm453, %v537, %v513
          %v539 = vsel %vm452, %v345, %v536
          %v540 = vsel %vm452, 0, %v538
          %v541 = vcosq.f32.pop %v539
          %v542 = vsinq.f32.pop %v539
          %vm543 = vweird.f32 %v345
          %v544 = vadd.s32 %v540, 3
          %v545 = vand.u32 %v544, 3
          %vm546 = vcmp.lt.s32.totalorder %v545, 2
          %vm547 = vcmp.eq.s32.totalorder %v545, 0
          %v548 = vxor.u32 %v542, 2147483648
          %v549 = vsel %vm547, %v541, %v548
          %vm550 = vcmp.eq.s32.totalorder %v545, 2
          %v551 = vxor.u32 %v541, 2147483648
          %v552 = vsel %vm550, %v551, %v542
          %v553 = vsel %vm546, %v549, %v552
          %v554 = vsel %vm543, nan, %v553
          %v555 = vand.u32 2147483647, %v346
          %vm556 = vcmp.le.f32.partialorder %v555, 0.7853982
          %vm557 = vcmp.lt.s32.totalorder %v346, 0
          %v558 = vand.u32 %v346, 2139095040
          %v559 = vshrl.u32 %v558, 23
          %v560 = vsub.s32 %v559, 127
          %v561 = vand.u32 2147483647, %v346
          %v562 = vand.u32 %v561, 8388607
          %v563 = vor.u32 %v562, 8388608
          %v564 = vsub.s32 0, %v563
          %v565 = vadd.s32 %v560, 1
          %vm566 = vcmp.gt.s32.totalorder %v565, 0
          %v567 = vsel %vm566, %v565, 0
          %v568 = vshrl.u32 %v567, 5
          %v569 = vand.u32 %v567, 31
          %v570 = vsub.s32 32, %v569
          %v571 = vshrl.u32 683565275, %v570
          %v572 = vshll.u32 683565275, %v569
          %v573 = vshrl.u32 2475754826, %v570
          %v574 = vor.u32 %v572, %v573
          %v575 = vshll.u32 2475754826, %v569
          %v576 = vshrl.u32 2131351028, %v570
          %v577 = vor.u32 %v575, %v576
          %v578 = vshll.u32 2131351028, %v569
          %v579 = vshrl.u32 2102212464, %v570
          %v580 = vor.u32 %v578, %v579
          %v581 = vshll.u32 2102212464, %v569
          %v582 = vshrl.u32 920167782, %v570
          %v583 = vor.u32 %v581, %v582
          %v584 = vshll.u32 920167782, %v569
          %v585 = vshrl.u32 1326507024, %v570
          %v586 = vor.u32 %v584, %v585
          %vm587 = vcmp.lt.s32.totalorder %v568, 1
          %vm588 = vcmp.lt.s32.totalorder %v568, 2
          %vm589 = vcmp.lt.s32.totalorder %v568, 3
          %vm590 = vcmp.lt.s32.totalorder %v568, 4
          %v591 = vsel %vm587, %v571, %v574
          %v592 = vsel %vm590, %v580, 2102212464
          %v593 = vsel %vm589, %v577, %v592
          %v594 = vsel %vm588, %v591, %v593
          %v595 = vsel %vm587, %v574, %v577
          %v596 = vsel %vm590, %v583, 920167782
          %v597 = vsel %vm589, %v580, %v596
          %v598 = vsel %vm588, %v595, %v597
          %v599 = vsel %vm587, %v577, %v580
          %v600 = vsel %vm590, %v586, 1326507024
          %v601 = vsel %vm589, %v583, %v600
          %v602 = vsel %vm588, %v599, %v601
          %v603 = vshll.u32 %v563, 8
          %v604 = vmul.u32.u64.compose %v603, %v602
          %v605 = vextract.low.u32 %v604
          %v606 = vextract.high.u32 %v604
          %v607 = vmul.u32.u64.compose %v603, %v598
          %v608 = vextract.low.u32 %v607
          %v609 = vextract.high.u32 %v607
          %v610 = vmul.u32 %v603, %v594
          %v611 = vadd.s32 %v606, %v608
          %vm612 = vc.u32 %v606, %v608
          %v613 = vadd.s32 %v609, 1
          %v614 = vsel %vm612, %v613, %v609
          %v615 = vadd.s32 %v610, %v614
          %v616 = vadd.s32 %v615, 536870912
          %v617 = vshrl.u32 %v616, 30
          %v618 = vshll.u32 %v617, 30
          %v619 = vsub.s32 %v615, %v618
          %vm620 = vcmp.lt.s32.totalorder %v619, 0
          %v621 = vsub.s32 0, %v619
          %v622 = vsel %vm620, %v621, %v619
          %v623 = vclz %v622
          %v624 = vsub.s32 %v623, 2
          %vm625 = vcmp.gt.s32.totalorder 0, %v624
          %v626 = vsel %vm625, 0, %v624
          %v627 = vsub.s32 32, %v626
          %v628 = vshll.u32 %v619, %v626
          %v629 = vshrl.u32 %v611, %v627
          %v630 = vor.u32 %v628, %v629
          %v631 = vsub.s32 4294967266, %v626
          %v632 = vadd.s32 %v631, 127
          %v633 = vshll.u32 %v632, 23
          %v634 = vor.u32 4788187, %v633
          %v635 = vand.u32 2147483647, %v634
          %v637 = vcvt.s32.f32 %v630
          %v638 = vmul.f32 %v637, %v635
          %v639 = vxor.u32 %v638, 2147483648
          %v640 = vsel %vm557, %v639, %v638
          %v641 = vsub.s32 4, %v617
          %v642 = vsel %vm557, %v641, %v617
          %v643 = vsel %vm556, %v346, %v640
          %v644 = vsel %vm556, 0, %v642
          %v645 = vcosq.f32.pop %v643
          %v646 = vsinq.f32.pop %v643
          %vm647 = vweird.f32 %v346
          %v648 = vadd.s32 %v644, 3
          %v649 = vand.u32 %v648, 3
          %vm650 = vcmp.lt.s32.totalorder %v649, 2
          %vm651 = vcmp.eq.s32.totalorder %v649, 0
          %v652 = vxor.u32 %v646, 2147483648
          %v653 = vsel %vm651, %v645, %v652
          %vm654 = vcmp.eq.s32.totalorder %v649, 2
          %v655 = vxor.u32 %v645, 2147483648
          %v656 = vsel %vm654, %v655, %v646
          %v657 = vsel %vm650, %v653, %v656
          %v658 = vsel %vm647, nan, %v657
          %v659 = vand.u32 2147483647, %v344
          %vm660 = vcmp.le.f32.partialorder %v659, 0.7853982
          %vm661 = vcmp.lt.s32.totalorder %v344, 0
          %v662 = vand.u32 %v344, 2139095040
          %v663 = vshrl.u32 %v662, 23
          %v664 = vsub.s32 %v663, 127
          %v665 = vand.u32 2147483647, %v344
          %v666 = vand.u32 %v665, 8388607
          %v667 = vor.u32 %v666, 8388608
          %v668 = vsub.s32 0, %v667
          %v669 = vadd.s32 %v664, 1
          %vm670 = vcmp.gt.s32.totalorder %v669, 0
          %v671 = vsel %vm670, %v669, 0
          %v672 = vshrl.u32 %v671, 5
          %v673 = vand.u32 %v671, 31
          %v674 = vsub.s32 32, %v673
          %v675 = vshrl.u32 683565275, %v674
          %v676 = vshll.u32 683565275, %v673
          %v677 = vshrl.u32 2475754826, %v674
          %v678 = vor.u32 %v676, %v677
          %v679 = vshll.u32 2475754826, %v673
          %v680 = vshrl.u32 2131351028, %v674
          %v681 = vor.u32 %v679, %v680
          %v682 = vshll.u32 2131351028, %v673
          %v683 = vshrl.u32 2102212464, %v674
          %v684 = vor.u32 %v682, %v683
          %v685 = vshll.u32 2102212464, %v673
          %v686 = vshrl.u32 920167782, %v674
          %v687 = vor.u32 %v685, %v686
          %v688 = vshll.u32 920167782, %v673
          %v689 = vshrl.u32 1326507024, %v674
          %v690 = vor.u32 %v688, %v689
          %vm691 = vcmp.lt.s32.totalorder %v672, 1
          %vm692 = vcmp.lt.s32.totalorder %v672, 2
          %vm693 = vcmp.lt.s32.totalorder %v672, 3
          %vm694 = vcmp.lt.s32.totalorder %v672, 4
          %v695 = vsel %vm691, %v675, %v678
          %v696 = vsel %vm694, %v684, 2102212464
          %v697 = vsel %vm693, %v681, %v696
          %v698 = vsel %vm692, %v695, %v697
          %v699 = vsel %vm691, %v678, %v681
          %v700 = vsel %vm694, %v687, 920167782
          %v701 = vsel %vm693, %v684, %v700
          %v702 = vsel %vm692, %v699, %v701
          %v703 = vsel %vm691, %v681, %v684
          %v704 = vsel %vm694, %v690, 1326507024
          %v705 = vsel %vm693, %v687, %v704
          %v706 = vsel %vm692, %v703, %v705
          %v707 = vshll.u32 %v667, 8
          %v708 = vmul.u32.u64.compose %v707, %v706
          %v709 = vextract.low.u32 %v708
          %v710 = vextract.high.u32 %v708
          %v711 = vmul.u32.u64.compose %v707, %v702
          %v712 = vextract.low.u32 %v711
          %v713 = vextract.high.u32 %v711
          %v714 = vmul.u32 %v707, %v698
          %v715 = vadd.s32 %v710, %v712
          %vm716 = vc.u32 %v710, %v712
          %v717 = vadd.s32 %v713, 1
          %v718 = vsel %vm716, %v717, %v713
          %v719 = vadd.s32 %v714, %v718
          %v720 = vadd.s32 %v719, 536870912
          %v721 = vshrl.u32 %v720, 30
          %v722 = vshll.u32 %v721, 30
          %v723 = vsub.s32 %v719, %v722
          %vm724 = vcmp.lt.s32.totalorder %v723, 0
          %v725 = vsub.s32 0, %v723
          %v726 = vsel %vm724, %v725, %v723
          %v727 = vclz %v726
          %v728 = vsub.s32 %v727, 2
          %vm729 = vcmp.gt.s32.totalorder 0, %v728
          %v730 = vsel %vm729, 0, %v728
          %v731 = vsub.s32 32, %v730
          %v732 = vshll.u32 %v723, %v730
          %v733 = vshrl.u32 %v715, %v731
          %v734 = vor.u32 %v732, %v733
          %v735 = vsub.s32 4294967266, %v730
          %v736 = vadd.s32 %v735, 127
          %v737 = vshll.u32 %v736, 23
          %v738 = vor.u32 4788187, %v737
          %v739 = vand.u32 2147483647, %v738
          %v741 = vcvt.s32.f32 %v734
          %v742 = vmul.f32 %v741, %v739
          %v743 = vxor.u32 %v742, 2147483648
          %v744 = vsel %vm661, %v743, %v742
          %v745 = vsub.s32 4, %v721
          %v746 = vsel %vm661, %v745, %v721
          %v747 = vsel %vm660, %v344, %v744
          %v748 = vsel %vm660, 0, %v746
          %v749 = vcosq.f32.pop %v747
          %v750 = vsinq.f32.pop %v747
          %vm751 = vweird.f32 %v344
          %v752 = vand.u32 %v748, 3
          %vm753 = vcmp.lt.s32.totalorder %v752, 2
          %vm754 = vcmp.eq.s32.totalorder %v752, 0
          %v755 = vxor.u32 %v750, 2147483648
          %v756 = vsel %vm754, %v749, %v755
          %vm757 = vcmp.eq.s32.totalorder %v752, 2
          %v758 = vxor.u32 %v749, 2147483648
          %v759 = vsel %vm757, %v758, %v750
          %v760 = vsel %vm753, %v756, %v759
          %v761 = vsel %vm751, nan, %v760
          %v762 = vand.u32 2147483647, %v345
          %vm763 = vcmp.le.f32.partialorder %v762, 0.7853982
          %vm764 = vcmp.lt.s32.totalorder %v345, 0
          %v765 = vand.u32 %v345, 2139095040
          %v766 = vshrl.u32 %v765, 23
          %v767 = vsub.s32 %v766, 127
          %v768 = vand.u32 2147483647, %v345
          %v769 = vand.u32 %v768, 8388607
          %v770 = vor.u32 %v769, 8388608
          %v771 = vsub.s32 0, %v770
          %v772 = vadd.s32 %v767, 1
          %vm773 = vcmp.gt.s32.totalorder %v772, 0
          %v774 = vsel %vm773, %v772, 0
          %v775 = vshrl.u32 %v774, 5
          %v776 = vand.u32 %v774, 31
          %v777 = vsub.s32 32, %v776
          %v778 = vshrl.u32 683565275, %v777
          %v779 = vshll.u32 683565275, %v776
          %v780 = vshrl.u32 2475754826, %v777
          %v781 = vor.u32 %v779, %v780
          %v782 = vshll.u32 2475754826, %v776
          %v783 = vshrl.u32 2131351028, %v777
          %v784 = vor.u32 %v782, %v783
          %v785 = vshll.u32 2131351028, %v776
          %v786 = vshrl.u32 2102212464, %v777
          %v787 = vor.u32 %v785, %v786
          %v788 = vshll.u32 2102212464, %v776
          %v789 = vshrl.u32 920167782, %v777
          %v790 = vor.u32 %v788, %v789
          %v791 = vshll.u32 920167782, %v776
          %v792 = vshrl.u32 1326507024, %v777
          %v793 = vor.u32 %v791, %v792
          %vm794 = vcmp.lt.s32.totalorder %v775, 1
          %vm795 = vcmp.lt.s32.totalorder %v775, 2
          %vm796 = vcmp.lt.s32.totalorder %v775, 3
          %vm797 = vcmp.lt.s32.totalorder %v775, 4
          %v798 = vsel %vm794, %v778, %v781
          %v799 = vsel %vm797, %v787, 2102212464
          %v800 = vsel %vm796, %v784, %v799
          %v801 = vsel %vm795, %v798, %v800
          %v802 = vsel %vm794, %v781, %v784
          %v803 = vsel %vm797, %v790, 920167782
          %v804 = vsel %vm796, %v787, %v803
          %v805 = vsel %vm795, %v802, %v804
          %v806 = vsel %vm794, %v784, %v787
          %v807 = vsel %vm797, %v793, 1326507024
          %v808 = vsel %vm796, %v790, %v807
          %v809 = vsel %vm795, %v806, %v808
          %v810 = vshll.u32 %v770, 8
          %v811 = vmul.u32.u64.compose %v810, %v809
          %v812 = vextract.low.u32 %v811
          %v813 = vextract.high.u32 %v811
          %v814 = vmul.u32.u64.compose %v810, %v805
          %v815 = vextract.low.u32 %v814
          %v816 = vextract.high.u32 %v814
          %v817 = vmul.u32 %v810, %v801
          %v818 = vadd.s32 %v813, %v815
          %vm819 = vc.u32 %v813, %v815
          %v820 = vadd.s32 %v816, 1
          %v821 = vsel %vm819, %v820, %v816
          %v822 = vadd.s32 %v817, %v821
          %v823 = vadd.s32 %v822, 536870912
          %v824 = vshrl.u32 %v823, 30
          %v825 = vshll.u32 %v824, 30
          %v826 = vsub.s32 %v822, %v825
          %vm827 = vcmp.lt.s32.totalorder %v826, 0
          %v828 = vsub.s32 0, %v826
          %v829 = vsel %vm827, %v828, %v826
          %v830 = vclz %v829
          %v831 = vsub.s32 %v830, 2
          %vm832 = vcmp.gt.s32.totalorder 0, %v831
          %v833 = vsel %vm832, 0, %v831
          %v834 = vsub.s32 32, %v833
          %v835 = vshll.u32 %v826, %v833
          %v836 = vshrl.u32 %v818, %v834
          %v837 = vor.u32 %v835, %v836
          %v838 = vsub.s32 4294967266, %v833
          %v839 = vadd.s32 %v838, 127
          %v840 = vshll.u32 %v839, 23
          %v841 = vor.u32 4788187, %v840
          %v842 = vand.u32 2147483647, %v841
          %v844 = vcvt.s32.f32 %v837
          %v845 = vmul.f32 %v844, %v842
          %v846 = vxor.u32 %v845, 2147483648
          %v847 = vsel %vm764, %v846, %v845
          %v848 = vsub.s32 4, %v824
          %v849 = vsel %vm764, %v848, %v824
          %v850 = vsel %vm763, %v345, %v847
          %v851 = vsel %vm763, 0, %v849
          %v852 = vcosq.f32.pop %v850
          %v853 = vsinq.f32.pop %v850
          %vm854 = vweird.f32 %v345
          %v855 = vand.u32 %v851, 3
          %vm856 = vcmp.lt.s32.totalorder %v855, 2
          %vm857 = vcmp.eq.s32.totalorder %v855, 0
          %v858 = vxor.u32 %v853, 2147483648
          %v859 = vsel %vm857, %v852, %v858
          %vm860 = vcmp.eq.s32.totalorder %v855, 2
          %v861 = vxor.u32 %v852, 2147483648
          %v862 = vsel %vm860, %v861, %v853
          %v863 = vsel %vm856, %v859, %v862
          %v864 = vsel %vm854, nan, %v863
          %v865 = vand.u32 2147483647, %v346
          %vm866 = vcmp.le.f32.partialorder %v865, 0.7853982
          %vm867 = vcmp.lt.s32.totalorder %v346, 0
          %v868 = vand.u32 %v346, 2139095040
          %v869 = vshrl.u32 %v868, 23
          %v870 = vsub.s32 %v869, 127
          %v871 = vand.u32 2147483647, %v346
          %v872 = vand.u32 %v871, 8388607
          %v873 = vor.u32 %v872, 8388608
          %v874 = vsub.s32 0, %v873
          %v875 = vadd.s32 %v870, 1
          %vm876 = vcmp.gt.s32.totalorder %v875, 0
          %v877 = vsel %vm876, %v875, 0
          %v878 = vshrl.u32 %v877, 5
          %v879 = vand.u32 %v877, 31
          %v880 = vsub.s32 32, %v879
          %v881 = vshrl.u32 683565275, %v880
          %v882 = vshll.u32 683565275, %v879
          %v883 = vshrl.u32 2475754826, %v880
          %v884 = vor.u32 %v882, %v883
          %v885 = vshll.u32 2475754826, %v879
          %v886 = vshrl.u32 2131351028, %v880
          %v887 = vor.u32 %v885, %v886
          %v888 = vshll.u32 2131351028, %v879
          %v889 = vshrl.u32 2102212464, %v880
          %v890 = vor.u32 %v888, %v889
          %v891 = vshll.u32 2102212464, %v879
          %v892 = vshrl.u32 920167782, %v880
          %v893 = vor.u32 %v891, %v892
          %v894 = vshll.u32 920167782, %v879
          %v895 = vshrl.u32 1326507024, %v880
          %v896 = vor.u32 %v894, %v895
          %vm897 = vcmp.lt.s32.totalorder %v878, 1
          %vm898 = vcmp.lt.s32.totalorder %v878, 2
          %vm899 = vcmp.lt.s32.totalorder %v878, 3
          %vm900 = vcmp.lt.s32.totalorder %v878, 4
          %v901 = vsel %vm897, %v881, %v884
          %v902 = vsel %vm900, %v890, 2102212464
          %v903 = vsel %vm899, %v887, %v902
          %v904 = vsel %vm898, %v901, %v903
          %v905 = vsel %vm897, %v884, %v887
          %v906 = vsel %vm900, %v893, 920167782
          %v907 = vsel %vm899, %v890, %v906
          %v908 = vsel %vm898, %v905, %v907
          %v909 = vsel %vm897, %v887, %v890
          %v910 = vsel %vm900, %v896, 1326507024
          %v911 = vsel %vm899, %v893, %v910
          %v912 = vsel %vm898, %v909, %v911
          %v913 = vshll.u32 %v873, 8
          %v914 = vmul.u32.u64.compose %v913, %v912
          %v915 = vextract.low.u32 %v914
          %v916 = vextract.high.u32 %v914
          %v917 = vmul.u32.u64.compose %v913, %v908
          %v918 = vextract.low.u32 %v917
          %v919 = vextract.high.u32 %v917
          %v920 = vmul.u32 %v913, %v904
          %v921 = vadd.s32 %v916, %v918
          %vm922 = vc.u32 %v916, %v918
          %v923 = vadd.s32 %v919, 1
          %v924 = vsel %vm922, %v923, %v919
          %v925 = vadd.s32 %v920, %v924
          %v926 = vadd.s32 %v925, 536870912
          %v927 = vshrl.u32 %v926, 30
          %v928 = vshll.u32 %v927, 30
          %v929 = vsub.s32 %v925, %v928
          %vm930 = vcmp.lt.s32.totalorder %v929, 0
          %v931 = vsub.s32 0, %v929
          %v932 = vsel %vm930, %v931, %v929
          %v933 = vclz %v932
          %v934 = vsub.s32 %v933, 2
          %vm935 = vcmp.gt.s32.totalorder 0, %v934
          %v936 = vsel %vm935, 0, %v934
          %v937 = vsub.s32 32, %v936
          %v938 = vshll.u32 %v929, %v936
          %v939 = vshrl.u32 %v921, %v937
          %v940 = vor.u32 %v938, %v939
          %v941 = vsub.s32 4294967266, %v936
          %v942 = vadd.s32 %v941, 127
          %v943 = vshll.u32 %v942, 23
          %v944 = vor.u32 4788187, %v943
          %v945 = vand.u32 2147483647, %v944
          %v947 = vcvt.s32.f32 %v940
          %v948 = vmul.f32 %v947, %v945
          %v949 = vxor.u32 %v948, 2147483648
          %v950 = vsel %vm867, %v949, %v948
          %v951 = vsub.s32 4, %v927
          %v952 = vsel %vm867, %v951, %v927
          %v953 = vsel %vm866, %v346, %v950
          %v954 = vsel %vm866, 0, %v952
          %v955 = vcosq.f32.pop %v953
          %v956 = vsinq.f32.pop %v953
          %vm957 = vweird.f32 %v346
          %v958 = vand.u32 %v954, 3
          %vm959 = vcmp.lt.s32.totalorder %v958, 2
          %vm960 = vcmp.eq.s32.totalorder %v958, 0
          %v961 = vxor.u32 %v956, 2147483648
          %v962 = vsel %vm960, %v955, %v961
          %vm963 = vcmp.eq.s32.totalorder %v958, 2
          %v964 = vxor.u32 %v955, 2147483648
          %v965 = vsel %vm963, %v964, %v956
          %v966 = vsel %vm959, %v962, %v965
          %v967 = vsel %vm957, nan, %v966
          %v971 = vcombine.low %v761, %v864
          %v973 = vunpack.c.l.s4 1983009808
          %v974 = vunpack.c.0.s8 %v973
          %v975 = vlaneseq
          %v976 = vshrl.u32 %v975, 7
          %v977 = vsub.s32 %v974, %v976
          %v978 = vrot.slane %v971, %v977
          %v980 = vunpack.c.l.s4 1983009808
          %v981 = vunpack.c.0.s8 %v980
          %v982 = vlaneseq
          %v983 = vshrl.u32 %v982, 7
          %v984 = vsub.s32 %v981, %v983
          %v985 = vrot.slane %v967, %v984
          %v986 = vcombine.low %v978, %v985
          %988 = vst [vmem:[#allocation2] sm:$0x3f] %v986
          %v989 = vld [vmem:[%s2] sm:$0x7]
          %v991 = vlaneseq
          %v992 = vshrl.u32 %v991, 7
          %v993 = vsub.s32 0, %v992
          %v994 = vrot.slane %v989, %v993
          %v995 = vlaneseq
          %v996 = vshrl.u32 %v995, 7
          %v997 = vsub.s32 1, %v996
          %v998 = vrot.slane %v989, %v997
          %v999 = vlaneseq
          %v1000 = vshrl.u32 %v999, 7
          %v1001 = vsub.s32 2, %v1000
          %v1002 = vrot.slane %v989, %v1001
          %v1006 = vmul.f32 %v450, %v994
          %v1007 = vmul.f32 %v554, %v998
          %v1008 = vmul.f32 %v658, %v1002
          %v1012 = vcombine.low %v1006, %v1007
          %v1014 = vunpack.c.l.s4 1983009808
          %v1015 = vunpack.c.0.s8 %v1014
          %v1016 = vlaneseq
          %v1017 = vshrl.u32 %v1016, 7
          %v1018 = vsub.s32 %v1015, %v1017
          %v1019 = vrot.slane %v1012, %v1018
          %v1021 = vunpack.c.l.s4 1983009808
          %v1022 = vunpack.c.0.s8 %v1021
          %v1023 = vlaneseq
          %v1024 = vshrl.u32 %v1023, 7
          %v1025 = vsub.s32 %v1022, %v1024
          %v1026 = vrot.slane %v1008, %v1025
          %v1027 = vcombine.low %v1019, %v1026
          %1029 = vst [vmem:[#allocation3] sm:$0x3f] %v1027
          %v1030 = vld [vmem:[#allocation10] sm:$0x7]
          %v1032 = vlaneseq
          %v1033 = vshrl.u32 %v1032, 7
          %v1034 = vsub.s32 0, %v1033
          %v1035 = vrot.slane %v1030, %v1034
          %v1036 = vlaneseq
          %v1037 = vshrl.u32 %v1036, 7
          %v1038 = vsub.s32 1, %v1037
          %v1039 = vrot.slane %v1030, %v1038
          %v1040 = vlaneseq
          %v1041 = vshrl.u32 %v1040, 7
          %v1042 = vsub.s32 2, %v1041
          %v1043 = vrot.slane %v1030, %v1042
          %v1047 = vmul.f32 %v450, %v1035
          %v1048 = vmul.f32 %v554, %v1039
          %v1049 = vmul.f32 %v658, %v1043
          %v1053 = vcombine.low %v1047, %v1048
          %v1055 = vunpack.c.l.s4 1983009808
          %v1056 = vunpack.c.0.s8 %v1055
          %v1057 = vlaneseq
          %v1058 = vshrl.u32 %v1057, 7
          %v1059 = vsub.s32 %v1056, %v1058
          %v1060 = vrot.slane %v1053, %v1059
          %v1062 = vunpack.c.l.s4 1983009808
          %v1063 = vunpack.c.0.s8 %v1062
          %v1064 = vlaneseq
          %v1065 = vshrl.u32 %v1064, 7
          %v1066 = vsub.s32 %v1063, %v1065
          %v1067 = vrot.slane %v1049, %v1066
          %v1068 = vcombine.low %v1060, %v1067
          %1070 = vst [vmem:[#allocation4] sm:$0x3f] %v1068
        $region60: #{tpu_custom_call.1} parent=39 // pred_fallthru
          _
        %v1071 = vld [vmem:[%s270] sm:$0x3f]
        %v1073 = vcombine.high %v1071, %v1071
        %v1075 = vunpack.c.l.s4 1983009808
        %v1076 = vunpack.c.0.s8 %v1075
        %v1077 = vlaneseq
        %v1078 = vshrl.u32 %v1077, 7
        %v1079 = vsub.s32 %v1076, %v1078
        %v1080 = vrot.slane %v1071, %v1079
        %v1082 = vunpack.c.l.s4 1983009808
        %v1083 = vunpack.c.0.s8 %v1082
        %v1084 = vlaneseq
        %v1085 = vshrl.u32 %v1084, 7
        %v1086 = vsub.s32 %v1083, %v1085
        %v1087 = vrot.slane %v1073, %v1086
        %v1088 = vcombine.high %v1080, %v1080
        %1092 = vrot.lane.b32.xlu0 %v1080, 127
        %v1093 = vpop.permute.xlu0 %1092
        %1094 = vrot.lane.b32.xlu0 %v1088, 127
        %v1095 = vpop.permute.xlu0 %1094
        %1096 = vrot.lane.b32.xlu0 %v1087, 127
        %v1097 = vpop.permute.xlu0 %1096
        %v1098 = vlaneseq
        %v1099 = vand.u32 %v1098, 127
        %vm1100 = vcmp.lt.s32.totalorder %v1099, 127
        %v1101 = vsel %vm1100, %v1095, %v1097
        %v1102 = vsel %vm1100, %v1093, %v1095
        %v1103 = vsel %vm1100, %v1097, %v1093
        %1104 = vrot.lane.b32.xlu0 %v1080, 1
        %v1105 = vpop.permute.xlu0 %1104
        %1106 = vrot.lane.b32.xlu0 %v1088, 1
        %v1107 = vpop.permute.xlu0 %1106
        %1108 = vrot.lane.b32.xlu0 %v1087, 1
        %v1109 = vpop.permute.xlu0 %1108
        %vm1110 = vcmp.lt.s32.totalorder %v1099, 1
        %v1111 = vsel %vm1110, %v1107, %v1109
        %v1112 = vsel %vm1110, %v1105, %v1107
        %v1113 = vsel %vm1110, %v1109, %v1105
        %v1114 = vld [vmem:[#allocation2] sm:$0x3f]
        %v1115 = vmul.f32 %v1071, %v1114
        %v1116 = vld [vmem:[#allocation3] sm:$0x3f]
        %v1118 = vcombine.high %v1116, %v1116
        %v1120 = vunpack.c.l.s4 1983009808
        %v1121 = vunpack.c.0.s8 %v1120
        %v1122 = vlaneseq
        %v1123 = vshrl.u32 %v1122, 7
        %v1124 = vsub.s32 %v1121, %v1123
        %v1125 = vrot.slane %v1116, %v1124
        %v1127 = vunpack.c.l.s4 1983009808
        %v1128 = vunpack.c.0.s8 %v1127
        %v1129 = vlaneseq
        %v1130 = vshrl.u32 %v1129, 7
        %v1131 = vsub.s32 %v1128, %v1130
        %v1132 = vrot.slane %v1118, %v1131
        %v1133 = vcombine.high %v1125, %v1125
        %v1137 = vmul.f32 %v1102, %v1125
        %v1138 = vmul.f32 %v1101, %v1133
        %v1139 = vmul.f32 %v1103, %v1132
        %v1143 = vcombine.low %v1137, %v1138
        %v1145 = vunpack.c.l.s4 1983009808
        %v1146 = vunpack.c.0.s8 %v1145
        %v1147 = vlaneseq
        %v1148 = vshrl.u32 %v1147, 7
        %v1149 = vsub.s32 %v1146, %v1148
        %v1150 = vrot.slane %v1143, %v1149
        %v1152 = vunpack.c.l.s4 1983009808
        %v1153 = vunpack.c.0.s8 %v1152
        %v1154 = vlaneseq
        %v1155 = vshrl.u32 %v1154, 7
        %v1156 = vsub.s32 %v1153, %v1155
        %v1157 = vrot.slane %v1139, %v1156
        %v1158 = vcombine.low %v1150, %v1157
        %v1160 = vadd.f32 %v1115, %v1158
        %v1161 = vld [vmem:[#allocation4] sm:$0x3f]
        %v1163 = vcombine.high %v1161, %v1161
        %v1165 = vunpack.c.l.s4 1983009808
        %v1166 = vunpack.c.0.s8 %v1165
        %v1167 = vlaneseq
        %v1168 = vshrl.u32 %v1167, 7
        %v1169 = vsub.s32 %v1166, %v1168
        %v1170 = vrot.slane %v1161, %v1169
        %v1172 = vunpack.c.l.s4 1983009808
        %v1173 = vunpack.c.0.s8 %v1172
        %v1174 = vlaneseq
        %v1175 = vshrl.u32 %v1174, 7
        %v1176 = vsub.s32 %v1173, %v1175
        %v1177 = vrot.slane %v1163, %v1176
        %v1178 = vcombine.high %v1170, %v1170
        %v1182 = vmul.f32 %v1113, %v1170
        %v1183 = vmul.f32 %v1112, %v1178
        %v1184 = vmul.f32 %v1111, %v1177
        %v1188 = vcombine.low %v1182, %v1183
        %v1190 = vunpack.c.l.s4 1983009808
        %v1191 = vunpack.c.0.s8 %v1190
        %v1192 = vlaneseq
        %v1193 = vshrl.u32 %v1192, 7
        %v1194 = vsub.s32 %v1191, %v1193
        %v1195 = vrot.slane %v1188, %v1194
        %v1197 = vunpack.c.l.s4 1983009808
        %v1198 = vunpack.c.0.s8 %v1197
        %v1199 = vlaneseq
        %v1200 = vshrl.u32 %v1199, 7
        %v1201 = vsub.s32 %v1198, %v1200
        %v1202 = vrot.slane %v1184, %v1201
        %v1203 = vcombine.low %v1195, %v1202
        %v1205 = vadd.f32 %v1160, %v1203
        %1206 = vst [vmem:[%s296] sm:$0x3f] %v1205
        %s1207 = sand.u32 %s158, 1
        %s1208 = scalar_lea.sflag [#allocation7], %s1207
        %s1209 = sand.u32 %s158, 1
        %s1210 = smul.addr %s1209, 6
        %s1211 = scalar_lea.vmem [#allocation13], %s1210
        // Predicated region
        $region61: #{tpu_custom_call.1} parent=39 // pred_check
          %p1212 = pneg %p168
        $region62: #{tpu_custom_call.1} parent=39 // pred_check_branch
          %1214 = sbr.rel (%p1212) target = $region64
        $region63: #{tpu_custom_call.1} parent=39 // pred_region
          %s1216 = ssub.s32 96, 96
          %1217 = vsyncadd %s1208, %s1216
          %s1218 = smul.addr %s28, 3
          %s1219 = smul.addr %s29, 3
          %s1220 = sadd.s32 %s1218, %s1219
          %s1221 = smul.addr %s1220, 32
          %s1222 = scalar_lea.hbm %s5, %s1221
          %s1224 = sshll.u32 %s1211, 4
          %s1225 = int_to_ptr.vmem [resolvable:$true] %s1224
          %1227 = dma.vmem_to_hbm [thread:$0]  %s1225, 96, %s1222, %s1208
        $region64: #{tpu_custom_call.1} parent=39 // pred_fallthru
          _
      $region40: #{tpu_custom_call.1} parent=5 // pred_fallthru
        _
      %p1228 = scmp.le.s32.totalorder 2, %s19
      // Predicated region
      $region65: #{tpu_custom_call.1} parent=5 // pred_check
        %p1229 = pneg %p1228
      $region66: #{tpu_custom_call.1} parent=5 // pred_check_branch
        %1231 = sbr.rel (%p1229) target = $region68
      $region67: #{tpu_custom_call.1} parent=5 // pred_region
        %s1232 = ssub.s32 %s19, 2
        // Predicated region
        $region69: #{tpu_custom_call.1} parent=67 // pred_check
          %p1233 = pneg %p174
        $region70: #{tpu_custom_call.1} parent=67 // pred_check_branch
          %1235 = sbr.rel (%p1233) target = $region72
        $region71: #{tpu_custom_call.1} parent=67 // pred_region
          %s1236 = sand.u32 %s159, 1
          %s1237 = scalar_lea.sflag [#allocation7], %s1236
          %s1238 = sand.u32 %s159, 1
          %s1239 = smul.addr %s1238, 6
          %s1240 = scalar_lea.vmem [#allocation13], %s1239
          %1241 = dma.done %s1237, 96
        $region72: #{tpu_custom_call.1} parent=67 // pred_fallthru
          _
      $region68: #{tpu_custom_call.1} parent=5 // pred_fallthru
        _
    $region6: #{tpu_custom_call.1} parent=1 // loop_footer
      %s23 = sadd.s32 1, %s19
    $region7: #{tpu_custom_call.1} parent=1 // loop_footer_branch
      %18 = sbr.rel target = $region3
    $region8: #{tpu_custom_call.1} parent=1 // loop_exit
      _
    %1242 = vsyncpa [#allocation6], 1
    %s1243 = scalar_lea.sflag [#allocation6], 1
    %1244 = vsyncpa %s1243, 1
    %1245 = vsyncpa [#allocation9], 1
    %1246 = vsyncpa [#allocation12], 1
    %s1247 = scalar_lea.sflag [#allocation12], 1
    %1248 = vsyncpa %s1247, 1
    %1249 = vsyncpa [#allocation7], 1
    %s1250 = scalar_lea.sflag [#allocation7], 1
    %1251 = vsyncpa %s1250, 1

</llo_original>
